<compile_context>
chip_gen: v5e
topology: v5e:2x2
jax: 0.10.0
libtpu: 0.0.40
codegen_flags: <defaults>
</compile_context>

<pallas_src>
import functools
import math

import jax
import jax.numpy as jnp
from jax.experimental import pallas as pl
from jax.experimental.pallas import tpu as pltpu

ALPHA = 0.1          # residual/teleport coefficient used by conv_resi (APPNP-style)
BN_EPS = 1e-10

LANE = 128           # pad feature dims to multiples of the 128-lane vreg width
TILE_M = 256         # node-row tile for the MLP kernels (sublane axis)
NODE_PAD = 512       # node-dim padding granularity (= propagation row tile)
PROP_TILE_M = 512    # propagation row tile
PROP_TILE_K = (2048, 1024, 512)   # candidate contraction tiles over A's columns
SEED_CHUNK = 256     # row chunk used when seeding the bf16 x ping-pong buffer


# ---------------------------------------------------------------------------
# small helpers
# ---------------------------------------------------------------------------
def _round_up(x, m):
    return ((x + m - 1) // m) * m


def _pad2d(a, rows, cols):
    r, c = a.shape
    return jnp.pad(a, ((0, rows - r), (0, cols - c)))


def _pick_tile(n, candidates):
    for c in candidates:
        if n % c == 0:
            return c
    return n


def _vmem_budget_bytes():
    # Generation-aware scoped-VMEM budget: ~3/4 of physical capacity
    # (≈48 MiB on v7x's 64 MiB, ≈96 MiB on v5e/v6e's 128 MiB).
    cap = 64 * 1024 * 1024
    try:
        cap = int(pltpu.get_tpu_info().vmem_capacity_bytes)
    except Exception:
        pass
    return max(32 * 1024 * 1024, (cap * 3) // 4)


def _vmem_limit(est_bytes, budget):
    return int(min(budget, max(16 * 1024 * 1024, int(est_bytes * 1.5))))


# ---------------------------------------------------------------------------
# Pallas kernels
# ---------------------------------------------------------------------------
def _mlp_layer_kernel(*refs, apply_bn, compute_stats, n_real, tile_m):
    """One MLP layer for one row tile.

    Optionally applies BatchNorm1d(affine=False, eps=1e-10, batch stats) + ReLU
    to the *input* tile (fusing the previous layer's BN/activation into this
    matmul), then h = bn_relu(x) @ W + b on the MXU in bf16 with f32
    accumulation.  Optionally accumulates per-feature sum / sum-of-squares of h
    (real rows only) into resident (1, C) outputs for the next layer's BN.
    """
    it = iter(refs)
    x_ref = next(it)
    w_ref = next(it)
    b_ref = next(it)
    s_in = q_in = None
    if apply_bn:
        s_in = next(it)
        q_in = next(it)
    h_ref = next(it)
    s_out = q_out = None
    if compute_stats:
        s_out = next(it)
        q_out = next(it)

    i = pl.program_id(0)

    x = x_ref[...]
    if apply_bn:
        inv_n = 1.0 / float(n_real)
        mean = s_in[...] * inv_n                                   # (1, Cin)
        # TODO(synk): E[x^2]-E[x]^2 variance can cancel catastrophically for
        # large means; a Welford/shifted two-pass accumulation would be safer.
        var = jnp.maximum(q_in[...] * inv_n - mean * mean, 0.0)    # biased var
        inv_std = jax.lax.rsqrt(var + BN_EPS)
        x = jnp.maximum((x - mean) * inv_std, 0.0)
        # TODO(synk): dropout is identity here (module evaluated in eval mode).

    h = jnp.dot(x.astype(jnp.bfloat16), w_ref[...],
                preferred_element_type=jnp.float32) + b_ref[...]
    h_ref[...] = h

    if compute_stats:
        # Mask zero-padded rows so they do not pollute the BN batch statistics.
        row = i * tile_m + jax.lax.broadcasted_iota(jnp.int32, (tile_m, 1), 0)
        valid = (row < n_real).astype(jnp.float32)
        hm = h * valid
        s = jnp.sum(hm, axis=0, keepdims=True)       # (1, C)
        q = jnp.sum(hm * hm, axis=0, keepdims=True)  # (1, C)

        @pl.when(i == 0)
        def _init():
            s_out[...] = jnp.zeros_like(s_out)
            q_out[...] = jnp.zeros_like(q_out)

        s_out[...] += s
        q_out[...] += q
        # TODO(synk): for v7x megacore, emit per-tile partials instead so this
        # axis can be "parallel" and the tiny reduction happens in the consumer.


def _prop_fused_kernel(x0_ref, a_ref, o_ref, xbuf, acc,
                       a_vmem=None, a_sem=None, *,
                       alpha, tile_m, tile_k, resident_a):
    """All `num_mps` APPNP residual steps fused into one kernel.

    grid = (num_mps, row_tiles, k_tiles).  x lives in a bf16 ping-pong scratch
    (2, Npad, Cpad) indexed by step parity; x0 stays resident in VMEM (f32,
    constant index map).  A is either DMA'd once into VMEM (resident_a) or
    streamed tile-by-tile from HBM.  f32 accumulator; residual math in f32.
    """
    s = pl.program_id(0)
    i = pl.program_id(1)
    k = pl.program_id(2)
    ns = pl.num_programs(0)
    nk = pl.num_programs(2)

    @pl.when((s == 0) & (i == 0) & (k == 0))
    def _seed():
        if resident_a:
            pltpu.make_async_copy(a_ref, a_vmem, a_sem).start()
        # Seed x ping-pong slot 0 with bf16(x0), chunked to bound vreg pressure.
        n_chunks = x0_ref.shape[0] // SEED_CHUNK
        for c in range(n_chunks):
            off = c * SEED_CHUNK
            xbuf[0, pl.ds(off, SEED_CHUNK), :] = (
                x0_ref[pl.ds(off, SEED_CHUNK), :].astype(jnp.bfloat16))
        if resident_a:
            pltpu.make_async_copy(a_ref, a_vmem, a_sem).wait()

    cur = jax.lax.rem(s, 2)          # read slot for this step
    i0 = pl.multiple_of(i * tile_m, tile_m)
    k0 = pl.multiple_of(k * tile_k, tile_k)

    if resident_a:
        a_tile = a_vmem[pl.ds(i0, tile_m), pl.ds(k0, tile_k)]
    else:
        a_tile = a_ref[...]
    xk = xbuf[cur, pl.ds(k0, tile_k), :]

    contrib = jnp.dot(a_tile, xk, preferred_element_type=jnp.float32)

    @pl.when(k == 0)
    def _first_k():
        acc[...] = contrib

    @pl.when(k > 0)
    def _accum_k():
        acc[...] += contrib

    @pl.when(k == nk - 1)
    def _finish_row_tile():
        new_rows = (1.0 - alpha) * acc[...] + alpha * x0_ref[pl.ds(i0, tile_m), :]

        @pl.when(s < ns - 1)
        def _store_next_step():
            xbuf[1 - cur, pl.ds(i0, tile_m), :] = new_rows.astype(jnp.bfloat16)

        @pl.when(s == ns - 1)
        def _store_output():
            o_ref[...] = new_rows


# ---------------------------------------------------------------------------
# pallas_call wrappers
# ---------------------------------------------------------------------------
def mlp_layer(x, w_bf16, b, stats, n_real, compute_stats, budget):
    """One fused (BN+ReLU ->) Linear (-> stats) layer over all row tiles."""
    npad, cin = x.shape
    cout = w_bf16.shape[1]
    nt = npad // TILE_M
    apply_bn = stats is not None

    inputs = [x, w_bf16, b]
    in_specs = [pl.BlockSpec((TILE_M, cin), lambda i: (i, 0)),
                pl.BlockSpec((cin, cout), lambda i: (0, 0)),
                pl.BlockSpec((1, cout), lambda i: (0, 0))]
    if apply_bn:
        inputs += [stats[0], stats[1]]
        in_specs += [pl.BlockSpec((1, cin), lambda i: (0, 0)),
                     pl.BlockSpec((1, cin), lambda i: (0, 0))]

    if compute_stats:
        out_shape = (jax.ShapeDtypeStruct((npad, cout), jnp.float32),
                     jax.ShapeDtypeStruct((1, cout), jnp.float32),
                     jax.ShapeDtypeStruct((1, cout), jnp.float32))
        out_specs = (pl.BlockSpec((TILE_M, cout), lambda i: (i, 0)),
                     pl.BlockSpec((1, cout), lambda i: (0, 0)),
                     pl.BlockSpec((1, cout), lambda i: (0, 0)))
        semantics = ("arbitrary",)      # stats accumulate across row tiles
    else:
        out_shape = jax.ShapeDtypeStruct((npad, cout), jnp.float32)
        out_specs = pl.BlockSpec((TILE_M, cout), lambda i: (i, 0))
        semantics = ("parallel",)       # independent row tiles (megacore)

    # TODO(synk): for very wide hidden layers, tile cin/cout with an f32
    # accumulator instead of holding the full (cin, cout) weight per row tile.
    est = (2 * TILE_M * cin * 4 + 2 * cin * cout * 2 + 2 * cout * 4
           + 2 * TILE_M * cout * 4 + 8 * (cin + cout) * 4 + (1 << 20))
    kernel = functools.partial(_mlp_layer_kernel, apply_bn=apply_bn,
                               compute_stats=compute_stats,
                               n_real=n_real, tile_m=TILE_M)
    return pl.pallas_call(
        kernel,
        out_shape=out_shape,
        grid=(nt,),
        in_specs=in_specs,
        out_specs=out_specs,
        compiler_params=pltpu.CompilerParams(
            dimension_semantics=semantics,
            vmem_limit_bytes=_vmem_limit(est, budget)),
    )(*inputs)


def appnp_propagate(a_bf16, x0, num_mps, alpha, budget, allow_resident=True):
    npad, cpad = x0.shape
    tile_m = _pick_tile(npad, (PROP_TILE_M,))
    tile_k = _pick_tile(npad, PROP_TILE_K)
    ni = npad // tile_m
    nk = npad // tile_k

    a_bytes = npad * npad * 2
    base = (2 * npad * cpad * 4        # x0 (double-buffered f32 full block)
            + 2 * npad * cpad * 2      # bf16 x ping-pong scratch
            + tile_m * cpad * 4        # K accumulator
            + 2 * tile_m * cpad * 4)   # output double buffer
    resident = allow_resident and (base + a_bytes <= int(0.6 * budget))

    kernel = functools.partial(_prop_fused_kernel, alpha=float(alpha),
                               tile_m=tile_m, tile_k=tile_k, resident_a=resident)

    x0_spec = pl.BlockSpec((npad, cpad), lambda s, i, k: (0, 0))
    out_spec = pl.BlockSpec((tile_m, cpad), lambda s, i, k: (i, 0))
    scratch = [pltpu.VMEM((2, npad, cpad), jnp.bfloat16),   # x ping-pong
               pltpu.VMEM((tile_m, cpad), jnp.float32)]     # acc
    if resident:
        # DMA the whole bf16 adjacency into VMEM once, reuse across all steps.
        a_spec = pl.BlockSpec(memory_space=pl.ANY)
        scratch += [pltpu.VMEM((npad, npad), jnp.bfloat16),
                    pltpu.SemaphoreType.DMA]
        est = base + a_bytes
        a_hbm_reads = 1
    else:
        a_spec = pl.BlockSpec((tile_m, tile_k), lambda s, i, k: (i, k))
        est = base + 2 * tile_m * tile_k * 2
        a_hbm_reads = num_mps

    # TODO(synk): on v7x, split the row-tile axis across the two TensorCores
    # (core_map / core-parallel leading axis) for ~2x on this dominant kernel.
    flops = 2 * num_mps * npad * npad * cpad
    bytes_accessed = a_hbm_reads * a_bytes + 2 * npad * cpad * 4

    return pl.pallas_call(
        kernel,
        out_shape=jax.ShapeDtypeStruct((npad, cpad), jnp.float32),
        grid=(num_mps, ni, nk),
        in_specs=[x0_spec, a_spec],
        out_specs=out_spec,
        scratch_shapes=scratch,
        compiler_params=pltpu.CompilerParams(
            # all axes sequential: ping-pong / acc scratch shared across tiles & steps
            dimension_semantics=("arbitrary", "arbitrary", "arbitrary"),
            vmem_limit_bytes=_vmem_limit(est, budget)),
        cost_estimate=pl.CostEstimate(flops=flops, transcendentals=0,
                                      bytes_accessed=bytes_accessed),
    )(x0, a_bf16)


# ---------------------------------------------------------------------------
# Glue: parameters, normalized adjacency, full forward, pure-JAX reference
# ---------------------------------------------------------------------------
def xavier_uniform(key, fan_in, fan_out, gain):
    bound = gain * math.sqrt(6.0 / (fan_in + fan_out))
    # PyTorch Linear weight is (out, in); we store the transpose (in, out).
    return jax.random.uniform(key, (fan_in, fan_out), minval=-bound,
                              maxval=bound, dtype=jnp.float32)


def init_params(key, in_channels, hidden_channels, out_channels, num_layers):
    dims = [in_channels] + [hidden_channels] * (num_layers - 1) + [out_channels]
    params = []
    for li in range(num_layers):
        key, sub = jax.random.split(key)
        w = xavier_uniform(sub, dims[li], dims[li + 1], gain=1.414)
        b = jnp.zeros((1, dims[li + 1]), dtype=jnp.float32)
        params.append((w, b))
    return params


def build_norm_adj(edge_index, num_nodes, padded_size):
    # gcn_conv normalization: w_e = d[row]^-1/2 * d[col]^-1/2 with deg scattered
    # over `col`; dense adjacency stored as A[col, row] (padded region stays zero).
    # TODO(synk): fp8(e4m3)/int8 A with per-row scales would halve HBM traffic
    # further but needs an accuracy gate over num_mps steps.
    row, col = edge_index[0], edge_index[1]
    ew = jnp.ones(row.shape[0], dtype=jnp.float32)
    deg = jnp.zeros((num_nodes,), jnp.float32).at[col].add(ew)
    dinv = jnp.where(deg > 0, 1.0 / jnp.sqrt(deg), 0.0)
    w = dinv[row] * ew * dinv[col]
    a = jnp.zeros((padded_size, padded_size), jnp.float32).at[col, row].add(w)
    return a


def pmlp_appnp_resinf_forward(params, x, edge_index, num_mps, use_conv=True,
                              alpha=ALPHA, allow_resident_a=True):
    n_real, in_ch = x.shape
    out_ch = params[-1][0].shape[1]
    npad = _round_up(n_real, NODE_PAD)
    budget = _vmem_budget_bytes()

    # Pad once in the wrapper; kernels only ever see lane-dense, aligned tiles.
    xp = _pad2d(x.astype(jnp.float32), npad, _round_up(in_ch, LANE))

    def pad_layer(w, b):
        ci, co = w.shape
        wp = _pad2d(w, _round_up(ci, LANE), _round_up(co, LANE)).astype(jnp.bfloat16)
        bp = _pad2d(b, 1, _round_up(co, LANE))
        return wp, bp

    stats = None
    n_layers = len(params)
    for li, (w, b) in enumerate(params):
        wp, bp = pad_layer(w, b)
        last = (li == n_layers - 1)
        res = mlp_layer(xp, wp, bp, stats, n_real,
                        compute_stats=not last, budget=budget)
        if not last:
            xp, ssum, ssq = res      # raw fc output + its BN batch statistics
            stats = (ssum, ssq)      # BN+ReLU applied by the *next* layer's kernel
        else:
            xp = res                 # final fc (BN+ReLU of the previous layer fused in)

    if num_mps > 0:
        a = build_norm_adj(edge_index, n_real, npad).astype(jnp.bfloat16)
        xp = appnp_propagate(a, xp, num_mps, alpha if use_conv else 0.0,
                             budget=budget, allow_resident=allow_resident_a)

    return xp[:n_real, :out_ch]


def reference_forward(params, x, edge_index, num_mps, use_conv=True, alpha=ALPHA):
    h = x.astype(jnp.float32)
    for w, b in params[:-1]:
        h = h @ w + b
        mean = jnp.mean(h, axis=0, keepdims=True)
        var = jnp.mean((h - mean) ** 2, axis=0, keepdims=True)
        h = jnp.maximum((h - mean) * jax.lax.rsqrt(var + BN_EPS), 0.0)
    w, b = params[-1]
    h = h @ w + b
    x0 = h
    a = build_norm_adj(edge_index, x.shape[0], x.shape[0])
    al = alpha if use_conv else 0.0
    for _ in range(num_mps):
        h = (1.0 - al) * (a @ h) + al * x0
    return h


# ---------------------------------------------------------------------------
if __name__ == "__main__":
    # Small, module-consistent config (300 nodes pads to 512 -> 2 MLP row tiles
    # and a single 512x512 propagation tile, exercising BN masking, BN fusion,
    # the fused multi-step propagation and both resident/streamed A paths).
    NUM_NODES = 300
    IN_CH, HIDDEN_CH, OUT_CH = 16, 32, 8
    NUM_LAYERS = 3
    NUM_MPS = 2
    NUM_EDGES = 900

    key = jax.random.PRNGKey(0)
    k_x, k_e, k_p = jax.random.split(key, 3)

    x = jax.random.normal(k_x, (NUM_NODES, IN_CH), dtype=jnp.float32)

    # deterministic random (symmetrized) edge list, shape (2, 2*E)
    src = jax.random.randint(k_e, (NUM_EDGES,), 0, NUM_NODES)
    dst = (src + 1 + jax.random.randint(jax.random.fold_in(k_e, 1),
                                        (NUM_EDGES,), 0, NUM_NODES - 1)) % NUM_NODES
    edge_index = jnp.stack(
        [jnp.concatenate([src, dst]), jnp.concatenate([dst, src])], axis=0
    ).astype(jnp.int32)

    params = init_params(k_p, IN_CH, HIDDEN_CH, OUT_CH, NUM_LAYERS)

    out = pmlp_appnp_resinf_forward(params, x, edge_index, NUM_MPS, use_conv=True)
    out = jax.block_until_ready(out)

    assert out.shape == (NUM_NODES, OUT_CH)
    assert bool(jnp.all(jnp.isfinite(out)))

    # pure-JAX reference check (loose tolerance: A / x / weights run in bf16)
    ref = reference_forward(params, x, edge_index, NUM_MPS, use_conv=True)
    rel_err = float(jnp.linalg.norm(out - ref) / (jnp.linalg.norm(ref) + 1e-12))
    assert rel_err < 5e-2, f"relative error too large: {rel_err}"

    # also exercise the HBM-streamed adjacency path and check it matches
    out_stream = pmlp_appnp_resinf_forward(params, x, edge_index, NUM_MPS,
                                           use_conv=True, allow_resident_a=False)
    out_stream = jax.block_until_ready(out_stream)
    assert bool(jnp.allclose(out, out_stream, atol=1e-4, rtol=1e-4))

    print("KERNEL_OK")
</pallas_src>

<mosaic_0001>
module attributes {stable_mosaic.version = 11 : i64} {
  func.func @_mlp_layer_kernel(%arg0: i32, %arg1: memref<256x128xf32, #tpu.memory_space<vmem>>, %arg2: memref<128x128xbf16, #tpu.memory_space<vmem>>, %arg3: memref<1x128xf32, #tpu.memory_space<vmem>>, %arg4: memref<256x128xf32, #tpu.memory_space<vmem>>, %arg5: memref<1x128xf32, #tpu.memory_space<vmem>>, %arg6: memref<1x128xf32, #tpu.memory_space<vmem>>) attributes {dimension_semantics = [#tpu.dimension_semantics<arbitrary>], iteration_bounds = array<i64: 2>, scalar_prefetch = 0 : i64, scratch_operands = 0 : i64, tpu.core_type = #tpu.core_type<tc>, window_params = [{transform_indices = @transform_0, window_bounds = array<i64: 256, 128>}, {pipeline_mode = #tpu.pipeline_mode<synchronous>, transform_indices = @transform_1, window_bounds = array<i64: 128, 128>}, {pipeline_mode = #tpu.pipeline_mode<synchronous>, transform_indices = @transform_2, window_bounds = array<i64: 1, 128>}, {transform_indices = @transform_3, window_bounds = array<i64: 256, 128>}, {pipeline_mode = #tpu.pipeline_mode<synchronous>, transform_indices = @transform_4, window_bounds = array<i64: 1, 128>}, {pipeline_mode = #tpu.pipeline_mode<synchronous>, transform_indices = @transform_5, window_bounds = array<i64: 1, 128>}]} {
    %c0 = arith.constant 0 : index
    %c0_0 = arith.constant 0 : index
    %0 = vector.load %arg1[%c0, %c0_0] : memref<256x128xf32, #tpu.memory_space<vmem>>, vector<256x128xf32>
    %1 = arith.truncf %0 : vector<256x128xf32> to vector<256x128xbf16>
    %c0_1 = arith.constant 0 : index
    %c0_2 = arith.constant 0 : index
    %2 = vector.load %arg2[%c0_1, %c0_2] : memref<128x128xbf16, #tpu.memory_space<vmem>>, vector<128x128xbf16>
    %cst = arith.constant dense<0.000000e+00> : vector<256x128xf32>
    %3 = tpu.matmul %1, %2, %cst {dimension_numbers = #tpu.dot_dimension_numbers<[1], [0], [0], [1], [0, 0, 1, 1], [], []>} : vector<256x128xbf16>, vector<128x128xbf16>, vector<256x128xf32> -> vector<256x128xf32>
    %c0_3 = arith.constant 0 : index
    %c0_4 = arith.constant 0 : index
    %4 = vector.load %arg3[%c0_3, %c0_4] : memref<1x128xf32, #tpu.memory_space<vmem>>, vector<1x128xf32>
    %5 = vector.broadcast %4 : vector<1x128xf32> to vector<256x128xf32>
    %6 = arith.addf %3, %5 : vector<256x128xf32>
    %c0_5 = arith.constant 0 : index
    %c0_6 = arith.constant 0 : index
    %7 = vector.load %arg4[%c0_5, %c0_6] : memref<256x128xf32, #tpu.memory_space<vmem>>, vector<256x128xf32>
    tpu.vector_store %arg4[%c0_5, %c0_6], %6 {strides = array<i32>} : memref<256x128xf32, #tpu.memory_space<vmem>>, vector<256x128xf32>,
    %c256_i32 = arith.constant 256 : i32
    %8 = arith.muli %arg0, %c256_i32 : i32
    %9 = tpu.iota {dimensions = array<i32: 0>} : vector<256x1xi32>
    %10 = vector.broadcast %8 : i32 to vector<256x1xi32>
    %11 = arith.addi %10, %9 : vector<256x1xi32>
    %c300_i32 = arith.constant 300 : i32
    %12 = vector.broadcast %c300_i32 : i32 to vector<256x1xi32>
    %13 = arith.cmpi slt, %11, %12 : vector<256x1xi32>
    %14 = arith.extui %13 : vector<256x1xi1> to vector<256x1xi32>
    %15 = arith.sitofp %14 : vector<256x1xi32> to vector<256x1xf32>
    %16 = vector.broadcast %15 : vector<256x1xf32> to vector<256x128xf32>
    %17 = arith.mulf %6, %16 : vector<256x128xf32>
    %cst_7 = arith.constant dense<0.000000e+00> : vector<128xf32>
    %18 = vector.multi_reduction <add>, %17, %cst_7 [0] : vector<256x128xf32> to vector<128xf32>
    %19 = vector.shape_cast %18 : vector<128xf32> to vector<1x128xf32>
    %20 = arith.mulf %17, %17 : vector<256x128xf32>
    %cst_8 = arith.constant dense<0.000000e+00> : vector<128xf32>
    %21 = vector.multi_reduction <add>, %20, %cst_8 [0] : vector<256x128xf32> to vector<128xf32>
    %22 = vector.shape_cast %21 : vector<128xf32> to vector<1x128xf32>
    %c0_i32 = arith.constant 0 : i32
    %23 = arith.cmpi eq, %arg0, %c0_i32 : i32
    %24 = arith.extui %23 : i1 to i32
    %c0_i32_9 = arith.constant 0 : i32
    %25 = arith.cmpi ne, %24, %c0_i32_9 : i32
    scf.if %25 {
      %cst_18 = arith.constant 0.000000e+00 : f32
      %32 = vector.broadcast %cst_18 : f32 to vector<1x128xf32>
      %c0_19 = arith.constant 0 : index
      %c0_20 = arith.constant 0 : index
      %33 = vector.load %arg5[%c0_19, %c0_20] : memref<1x128xf32, #tpu.memory_space<vmem>>, vector<1x128xf32>
      tpu.vector_store %arg5[%c0_19, %c0_20], %32 {strides = array<i32>} : memref<1x128xf32, #tpu.memory_space<vmem>>, vector<1x128xf32>,
      %cst_21 = arith.constant 0.000000e+00 : f32
      %34 = vector.broadcast %cst_21 : f32 to vector<1x128xf32>
      %c0_22 = arith.constant 0 : index
      %c0_23 = arith.constant 0 : index
      %35 = vector.load %arg6[%c0_22, %c0_23] : memref<1x128xf32, #tpu.memory_space<vmem>>, vector<1x128xf32>
      tpu.vector_store %arg6[%c0_22, %c0_23], %34 {strides = array<i32>} : memref<1x128xf32, #tpu.memory_space<vmem>>, vector<1x128xf32>,
    } else {
    }
    %c0_10 = arith.constant 0 : index
    %c0_11 = arith.constant 0 : index
    %26 = vector.load %arg5[%c0_10, %c0_11] : memref<1x128xf32, #tpu.memory_space<vmem>>, vector<1x128xf32>
    %27 = arith.addf %26, %19 : vector<1x128xf32>
    %c0_12 = arith.constant 0 : index
    %c0_13 = arith.constant 0 : index
    %28 = vector.load %arg5[%c0_12, %c0_13] : memref<1x128xf32, #tpu.memory_space<vmem>>, vector<1x128xf32>
    tpu.vector_store %arg5[%c0_12, %c0_13], %27 {strides = array<i32>} : memref<1x128xf32, #tpu.memory_space<vmem>>, vector<1x128xf32>,
    %c0_14 = arith.constant 0 : index
    %c0_15 = arith.constant 0 : index
    %29 = vector.load %arg6[%c0_14, %c0_15] : memref<1x128xf32, #tpu.memory_space<vmem>>, vector<1x128xf32>
    %30 = arith.addf %29, %22 : vector<1x128xf32>
    %c0_16 = arith.constant 0 : index
    %c0_17 = arith.constant 0 : index
    %31 = vector.load %arg6[%c0_16, %c0_17] : memref<1x128xf32, #tpu.memory_space<vmem>>, vector<1x128xf32>
    tpu.vector_store %arg6[%c0_16, %c0_17], %30 {strides = array<i32>} : memref<1x128xf32, #tpu.memory_space<vmem>>, vector<1x128xf32>,
    return
  }
  func.func @transform_0(%arg0: i32) -> (i32, i32) {
    %c0_i32 = arith.constant 0 : i32
    %c0_i32_0 = arith.constant 0 : i32
    return %arg0, %c0_i32 : i32, i32
  }
  func.func @transform_1(%arg0: i32) -> (i32, i32) {
    %c0_i32 = arith.constant 0 : i32
    %c0_i32_0 = arith.constant 0 : i32
    %c0_i32_1 = arith.constant 0 : i32
    return %c0_i32, %c0_i32_0 : i32, i32
  }
  func.func @transform_2(%arg0: i32) -> (i32, i32) {
    %c0_i32 = arith.constant 0 : i32
    %c0_i32_0 = arith.constant 0 : i32
    %c0_i32_1 = arith.constant 0 : i32
    return %c0_i32, %c0_i32_0 : i32, i32
  }
  func.func @transform_3(%arg0: i32) -> (i32, i32) {
    %c0_i32 = arith.constant 0 : i32
    %c0_i32_0 = arith.constant 0 : i32
    return %arg0, %c0_i32 : i32, i32
  }
  func.func @transform_4(%arg0: i32) -> (i32, i32) {
    %c0_i32 = arith.constant 0 : i32
    %c0_i32_0 = arith.constant 0 : i32
    %c0_i32_1 = arith.constant 0 : i32
    return %c0_i32, %c0_i32_0 : i32, i32
  }
  func.func @transform_5(%arg0: i32) -> (i32, i32) {
    %c0_i32 = arith.constant 0 : i32
    %c0_i32_0 = arith.constant 0 : i32
    %c0_i32_1 = arith.constant 0 : i32
    return %c0_i32, %c0_i32_0 : i32, i32
  }
}

</mosaic_0001>

<llo_original>
// kernel: tpu_custom_call.1
$region0: #{tpu_custom_call.1}
  #allocation0 [shape = 'u32[]', space=smem, size = 0x4, offset = 0x4, fixed_abs, tag = 'smem constant byte address 0x4 - core index']
  #allocation1 [shape = 'u32[72,128]{1,0:T(1,128)}', space=vmem, size = 0x9000, scoped, tag = 'internal scratch']
  %s0 = inlined_call_operand.hbm [shape: f32[512,128], index: 0, kind: input, shape index: {}]
  %s1 = inlined_call_operand.hbm [shape: bf16[128,128], index: 1, kind: input, shape index: {}]
  %s2 = inlined_call_operand.vmem [shape: f32[1,128], index: 2, kind: input, shape index: {}]
  %s3 = inlined_call_operand.hbm [shape: f32[512,128], index: 3, kind: output, shape index: {0}]
  %s4 = inlined_call_operand.hbm [shape: f32[1,128], index: 4, kind: output, shape index: {1}]
  %s5 = inlined_call_operand.hbm [shape: f32[1,128], index: 5, kind: output, shape index: {2}]
  %6 = xla_tuple %s3, %s4, %s5
  %s7 = sld [smem:[#allocation0]]
  $region73: #{tpu_custom_call.1} parent=0
    _
  %s9 = ssub.s32 1, %s7
  %s10 = scalar_select 0, %s9, %s7
  $region1: #{tpu_custom_call.1} parent=0
    #allocation2 [shape = 'u8[262144]{0}', space=vmem, size = 0x40000, scoped, tag = 'input window, operand 0']
    #allocation3 [shape = 's32[2]{0}', space=sflag, size = 0x8, scoped, tag = 'scoped memory for tpu_custom_call.1']
    #allocation4 [shape = 's32[2]{0}', space=sflag, size = 0x8, scoped, tag = 'scoped memory for tpu_custom_call.1']
    #allocation5 [shape = 'u8[32768]{0}', space=vmem, size = 0x8000, scoped, tag = 'input window, operand 1, single buffered']
    #allocation6 [shape = 's32[1]{0}', space=sflag, size = 0x4, scoped, tag = 'scoped memory for tpu_custom_call.1']
    #allocation7 [shape = 'u8[262144]{0}', space=vmem, size = 0x40000, scoped, tag = 'output window, operand 0']
    #allocation8 [shape = 'u8[512]{0}', space=vmem, size = 0x400, scoped, tag = 'output window, operand 1, single buffered']
    #allocation9 [shape = 's32[1]{0}', space=sflag, size = 0x4, scoped, tag = 'scoped memory for tpu_custom_call.1']
    #allocation10 [shape = 'u8[512]{0}', space=vmem, size = 0x400, scoped, tag = 'output window, operand 2, single buffered']
    %11 = vsyncpa [#allocation3], 0
    %s12 = scalar_lea.sflag [#allocation3], 1
    %13 = vsyncpa %s12, 0
    %14 = vsyncpa [#allocation6], 0
    %15 = vsyncpa [#allocation4], 0
    %s16 = scalar_lea.sflag [#allocation4], 1
    %17 = vsyncpa %s16, 0
    %18 = vsyncpa [#allocation9], 0
    loop: start=0, step=1, limit=4
    $region2: #{tpu_custom_call.1} parent=1 // loop_pre_header
      _
    $region3: #{tpu_custom_call.1} parent=1 // loop_header
      %s20 = sphi 0, %s24
      %p21 = scmp.ge.s32.totalorder %s20, 4
      %s30 = sphi 0, %s32
      %s33 = sphi 0, %s30
      %s34 = sphi 0, %s33
      %s50 = sphi 0, %s34
      %s54 = sphi 0, %s54
      %s56 = sphi 0, %s54
      %s57 = sphi 0, %s56
      %s71 = sphi 0, %s57
      %s75 = sphi 0, %s75
      %s77 = sphi 0, %s75
      %s78 = sphi 0, %s77
      %s92 = sphi 0, %s78
      %s98 = sphi 0, %s100
      %s101 = sphi 0, %s98
      %s102 = sphi 0, %s101
      %s118 = sphi 0, %s102
      %s122 = sphi 0, %s122
      %s124 = sphi 0, %s122
      %s125 = sphi 0, %s124
      %s139 = sphi 0, %s125
      %s143 = sphi 0, %s143
      %s145 = sphi 0, %s143
      %s146 = sphi 0, %s145
      %s160 = sphi 0, %s146
    $region4: #{tpu_custom_call.1} parent=1 // loop_header_branch
      %23 = sbr.rel (%p21) target = $region8
    $region5: #{tpu_custom_call.1} parent=1 // loop_body
      %s25 = ssub.s32 %s20, 1
      %s26 = ssub.s32 %s20, 2
      %s27 = sadd.s32 %s20, 1
      %s28 = ssub.s32 %s20, %s27
      %p29 = scmp.eq.s32.totalorder %s28, 0
      %s31 = sadd.s32 %s30, 1
      %s32 = scalar_select %p29, %s30, %s31
      %p35 = pneg %p29
      %p36 = scmp.eq.s32.totalorder %s20, 1
      %p37 = por %p35, %p36
      %p38 = scmp.ne.s32.totalorder %s30, %s33
      %p39 = scmp.eq.s32.totalorder %s20, 0
      %p40 = por %p38, %p39
      %p41 = scmp.ne.s32.totalorder %s30, %s33
      %p42 = scmp.eq.s32.totalorder %s25, 1
      %p43 = por %p41, %p42
      %p44 = scmp.ne.s32.totalorder %s33, %s34
      %p45 = scmp.eq.s32.totalorder %s25, 0
      %p46 = por %p44, %p45
      %p47 = scmp.ne.s32.totalorder %s33, %s34
      %p48 = scmp.eq.s32.totalorder %s26, 1
      %p49 = por %p47, %p48
      %p51 = scmp.ne.s32.totalorder %s34, %s50
      %p52 = scmp.eq.s32.totalorder %s26, 0
      %p53 = por %p51, %p52
      %s55 = sadd.s32 %s54, 1
      %p58 = scmp.eq.s32.totalorder %s20, 1
      %p59 = scmp.ne.s32.totalorder %s54, %s56
      %p60 = scmp.eq.s32.totalorder %s20, 0
      %p61 = por %p59, %p60
      %p62 = scmp.ne.s32.totalorder %s54, %s56
      %p63 = scmp.eq.s32.totalorder %s25, 1
      %p64 = por %p62, %p63
      %p65 = scmp.ne.s32.totalorder %s56, %s57
      %p66 = scmp.eq.s32.totalorder %s25, 0
      %p67 = por %p65, %p66
      %p68 = scmp.ne.s32.totalorder %s56, %s57
      %p69 = scmp.eq.s32.totalorder %s26, 1
      %p70 = por %p68, %p69
      %p72 = scmp.ne.s32.totalorder %s57, %s71
      %p73 = scmp.eq.s32.totalorder %s26, 0
      %p74 = por %p72, %p73
      %s76 = sadd.s32 %s75, 1
      %p79 = scmp.eq.s32.totalorder %s20, 1
      %p80 = scmp.ne.s32.totalorder %s75, %s77
      %p81 = scmp.eq.s32.totalorder %s20, 0
      %p82 = por %p80, %p81
      %p83 = scmp.ne.s32.totalorder %s75, %s77
      %p84 = scmp.eq.s32.totalorder %s25, 1
      %p85 = por %p83, %p84
      %p86 = scmp.ne.s32.totalorder %s77, %s78
      %p87 = scmp.eq.s32.totalorder %s25, 0
      %p88 = por %p86, %p87
      %p89 = scmp.ne.s32.totalorder %s77, %s78
      %p90 = scmp.eq.s32.totalorder %s26, 1
      %p91 = por %p89, %p90
      %p93 = scmp.ne.s32.totalorder %s78, %s92
      %p94 = scmp.eq.s32.totalorder %s26, 0
      %p95 = por %p93, %p94
      %s96 = ssub.s32 %s20, %s27
      %p97 = scmp.eq.s32.totalorder %s96, 0
      %s99 = sadd.s32 %s98, 1
      %s100 = scalar_select %p97, %s98, %s99
      %p103 = pneg %p97
      %p104 = scmp.eq.s32.totalorder %s20, 1
      %p105 = por %p103, %p104
      %p106 = scmp.ne.s32.totalorder %s98, %s101
      %p107 = scmp.eq.s32.totalorder %s20, 0
      %p108 = por %p106, %p107
      %p109 = scmp.ne.s32.totalorder %s98, %s101
      %p110 = scmp.eq.s32.totalorder %s25, 1
      %p111 = por %p109, %p110
      %p112 = scmp.ne.s32.totalorder %s101, %s102
      %p113 = scmp.eq.s32.totalorder %s25, 0
      %p114 = por %p112, %p113
      %p115 = scmp.ne.s32.totalorder %s101, %s102
      %p116 = scmp.eq.s32.totalorder %s26, 1
      %p117 = por %p115, %p116
      %p119 = scmp.ne.s32.totalorder %s102, %s118
      %p120 = scmp.eq.s32.totalorder %s26, 0
      %p121 = por %p119, %p120
      %s123 = sadd.s32 %s122, 1
      %p126 = scmp.eq.s32.totalorder %s20, 1
      %p127 = scmp.ne.s32.totalorder %s122, %s124
      %p128 = scmp.eq.s32.totalorder %s20, 0
      %p129 = por %p127, %p128
      %p130 = scmp.ne.s32.totalorder %s122, %s124
      %p131 = scmp.eq.s32.totalorder %s25, 1
      %p132 = por %p130, %p131
      %p133 = scmp.ne.s32.totalorder %s124, %s125
      %p134 = scmp.eq.s32.totalorder %s25, 0
      %p135 = por %p133, %p134
      %p136 = scmp.ne.s32.totalorder %s124, %s125
      %p137 = scmp.eq.s32.totalorder %s26, 1
      %p138 = por %p136, %p137
      %p140 = scmp.ne.s32.totalorder %s125, %s139
      %p141 = scmp.eq.s32.totalorder %s26, 0
      %p142 = por %p140, %p141
      %s144 = sadd.s32 %s143, 1
      %p147 = scmp.eq.s32.totalorder %s20, 1
      %p148 = scmp.ne.s32.totalorder %s143, %s145
      %p149 = scmp.eq.s32.totalorder %s20, 0
      %p150 = por %p148, %p149
      %p151 = scmp.ne.s32.totalorder %s143, %s145
      %p152 = scmp.eq.s32.totalorder %s25, 1
      %p153 = por %p151, %p152
      %p154 = scmp.ne.s32.totalorder %s145, %s146
      %p155 = scmp.eq.s32.totalorder %s25, 0
      %p156 = por %p154, %p155
      %p157 = scmp.ne.s32.totalorder %s145, %s146
      %p158 = scmp.eq.s32.totalorder %s26, 1
      %p159 = por %p157, %p158
      %p161 = scmp.ne.s32.totalorder %s146, %s160
      %p162 = scmp.eq.s32.totalorder %s26, 0
      %p163 = por %p161, %p162
      %p164 = scmp.le.s32.totalorder 1, %s20
      %p165 = scmp.lt.s32.totalorder %s20, 3
      %p166 = pnand %p164, %p165
      %p167 = pneg %p166
      // Predicated region
      $region9: #{tpu_custom_call.1} parent=5 // pred_check
        _
      $region10: #{tpu_custom_call.1} parent=5 // pred_check_branch
        %169 = sbr.rel (%p166) target = $region12
      $region11: #{tpu_custom_call.1} parent=5 // pred_region
        %s170 = ssub.s32 %s20, 1
        // Predicated region
        $region13: #{tpu_custom_call.1} parent=11 // pred_check
          %p171 = pneg %p67
        $region14: #{tpu_custom_call.1} parent=11 // pred_check_branch
          %173 = sbr.rel (%p171) target = $region16
        $region15: #{tpu_custom_call.1} parent=11 // pred_region
          %175 = vsyncadd [#allocation6], 0
          %s176 = sshll.u32 %s1, 4
          %s177 = int_to_ptr.hbm [resolvable:$true] %s176
          %s178 = sshll.u32 [#allocation5], 4
          %s179 = int_to_ptr.vmem [resolvable:$true] %s178
          %184 = dma.hbm_to_vmem [thread:$0]  %s177, 1024, %s179, [#allocation6], 64, 64, 4
        $region16: #{tpu_custom_call.1} parent=11 // pred_fallthru
          _
        // Predicated region
        $region17: #{tpu_custom_call.1} parent=11 // pred_check
          %p185 = pneg %p88
        $region18: #{tpu_custom_call.1} parent=11 // pred_check_branch
          %187 = sbr.rel (%p185) target = $region20
        $region19: #{tpu_custom_call.1} parent=11 // pred_region
          _
        $region20: #{tpu_custom_call.1} parent=11 // pred_fallthru
          _
      $region12: #{tpu_custom_call.1} parent=5 // pred_fallthru
        _
      %p188 = scmp.lt.s32.totalorder %s20, 2
      // Predicated region
      $region21: #{tpu_custom_call.1} parent=5 // pred_check
        %p189 = pneg %p188
      $region22: #{tpu_custom_call.1} parent=5 // pred_check_branch
        %191 = sbr.rel (%p189) target = $region24
      $region23: #{tpu_custom_call.1} parent=5 // pred_region
        // Predicated region
        $region25: #{tpu_custom_call.1} parent=23 // pred_check
          %p192 = pneg %p40
        $region26: #{tpu_custom_call.1} parent=23 // pred_check_branch
          %194 = sbr.rel (%p192) target = $region28
        $region27: #{tpu_custom_call.1} parent=23 // pred_region
          %s195 = sand.u32 %s30, 1
          %s196 = scalar_lea.sflag [#allocation3], %s195
          %s197 = sand.u32 %s30, 1
          %s198 = smul.addr %s197, 256
          %s199 = scalar_lea.vmem [#allocation2], %s198
          %s200 = smul.u32 32, %s20
          %202 = vsyncadd %s196, 0
          %s203 = smul.addr %s200, 8
          %s204 = scalar_lea.hbm %s0, %s203
          %s205 = sshll.u32 %s204, 4
          %s206 = int_to_ptr.hbm [resolvable:$true] %s205
          %s207 = sshll.u32 %s199, 4
          %s208 = int_to_ptr.vmem [resolvable:$true] %s207
          %213 = dma.hbm_to_vmem [thread:$0]  %s206, 4096, %s208, %s196, 128, 128, 8
        $region28: #{tpu_custom_call.1} parent=23 // pred_fallthru
          _
      $region24: #{tpu_custom_call.1} parent=5 // pred_fallthru
        _
      %p214 = scmp.le.s32.totalorder 1, %s20
      %p215 = scmp.lt.s32.totalorder %s20, 3
      %p216 = pnand %p214, %p215
      %p217 = pneg %p216
      // Predicated region
      $region29: #{tpu_custom_call.1} parent=5 // pred_check
        _
      $region30: #{tpu_custom_call.1} parent=5 // pred_check_branch
        %219 = sbr.rel (%p216) target = $region32
      $region31: #{tpu_custom_call.1} parent=5 // pred_region
        %s220 = ssub.s32 %s20, 1
        %s221 = sand.u32 %s33, 1
        %s222 = scalar_lea.sflag [#allocation3], %s221
        %s223 = sand.u32 %s33, 1
        %s224 = smul.addr %s223, 256
        %s225 = scalar_lea.vmem [#allocation2], %s224
        // Predicated region
        $region33: #{tpu_custom_call.1} parent=31 // pred_check
          %p226 = pneg %p46
        $region34: #{tpu_custom_call.1} parent=31 // pred_check_branch
          %228 = sbr.rel (%p226) target = $region36
        $region35: #{tpu_custom_call.1} parent=31 // pred_region
          %230 = dma.done %s222, 4096
        $region36: #{tpu_custom_call.1} parent=31 // pred_fallthru
          _
        // Predicated region
        $region37: #{tpu_custom_call.1} parent=31 // pred_check
          %p231 = pneg %p67
        $region38: #{tpu_custom_call.1} parent=31 // pred_check_branch
          %233 = sbr.rel (%p231) target = $region40
        $region39: #{tpu_custom_call.1} parent=31 // pred_region
          %235 = dma.done [#allocation6], 1024
        $region40: #{tpu_custom_call.1} parent=31 // pred_fallthru
          _
        %s236 = sand.u32 %s33, 1
        %s237 = scalar_lea.sflag [#allocation3], %s236
        %s238 = sand.u32 %s33, 1
        %s239 = smul.addr %s238, 256
        %s240 = scalar_lea.vmem [#allocation2], %s239
        %p241 = pneg %p46
        %p242 = pneg %p43
        %p243 = pneg %p67
        %p244 = pneg %p64
        %p245 = pneg %p88
        %p246 = pneg %p85
        %p247 = pneg %p114
        %p248 = pneg %p111
        %s249 = sand.u32 %s101, 1
        %s250 = scalar_lea.sflag [#allocation4], %s249
        %s251 = sand.u32 %s101, 1
        %s252 = smul.addr %s251, 256
        %s253 = scalar_lea.vmem [#allocation7], %s252
        %p254 = pneg %p135
        %p255 = pneg %p132
        %p256 = pneg %p156
        %p257 = pneg %p153
        %s258 = smul.u32 32, %s25
        %s259 = smul.u32 32, %s25
        %v260 = vld [vmem:[%s225] sm:$0xff]
        %v261 = vld [vmem:[%s225 + $0x8] sm:$0xff]
        %v262 = vld [vmem:[%s225 + $0x10] sm:$0xff]
        %v263 = vld [vmem:[%s225 + $0x18] sm:$0xff]
        %v264 = vld [vmem:[%s225 + $0x20] sm:$0xff]
        %v265 = vld [vmem:[%s225 + $0x28] sm:$0xff]
        %v266 = vld [vmem:[%s225 + $0x30] sm:$0xff]
        %v267 = vld [vmem:[%s225 + $0x38] sm:$0xff]
        %v268 = vld [vmem:[%s225 + $0x40] sm:$0xff]
        %v269 = vld [vmem:[%s225 + $0x48] sm:$0xff]
        %v270 = vld [vmem:[%s225 + $0x50] sm:$0xff]
        %v271 = vld [vmem:[%s225 + $0x58] sm:$0xff]
        %v272 = vld [vmem:[%s225 + $0x60] sm:$0xff]
        %v273 = vld [vmem:[%s225 + $0x68] sm:$0xff]
        %v274 = vld [vmem:[%s225 + $0x70] sm:$0xff]
        %v275 = vld [vmem:[%s225 + $0x78] sm:$0xff]
        %v276 = vld [vmem:[%s225 + $0x80] sm:$0xff]
        %v277 = vld [vmem:[%s225 + $0x88] sm:$0xff]
        %v278 = vld [vmem:[%s225 + $0x90] sm:$0xff]
        %v279 = vld [vmem:[%s225 + $0x98] sm:$0xff]
        %v280 = vld [vmem:[%s225 + $0xa0] sm:$0xff]
        %v281 = vld [vmem:[%s225 + $0xa8] sm:$0xff]
        %v282 = vld [vmem:[%s225 + $0xb0] sm:$0xff]
        %v283 = vld [vmem:[%s225 + $0xb8] sm:$0xff]
        %v284 = vld [vmem:[%s225 + $0xc0] sm:$0xff]
        %v285 = vld [vmem:[%s225 + $0xc8] sm:$0xff]
        %v286 = vld [vmem:[%s225 + $0xd0] sm:$0xff]
        %v287 = vld [vmem:[%s225 + $0xd8] sm:$0xff]
        %v288 = vld [vmem:[%s225 + $0xe0] sm:$0xff]
        %v289 = vld [vmem:[%s225 + $0xe8] sm:$0xff]
        %v290 = vld [vmem:[%s225 + $0xf0] sm:$0xff]
        %v291 = vld [vmem:[%s225 + $0xf8] sm:$0xff]
        %v292 = vpack.c.bf16 %v261, %v260
        %v293 = vpack.c.bf16 %v263, %v262
        %v294 = vpack.c.bf16 %v265, %v264
        %v295 = vpack.c.bf16 %v267, %v266
        %v296 = vpack.c.bf16 %v269, %v268
        %v297 = vpack.c.bf16 %v271, %v270
        %v298 = vpack.c.bf16 %v273, %v272
        %v299 = vpack.c.bf16 %v275, %v274
        %v300 = vpack.c.bf16 %v277, %v276
        %v301 = vpack.c.bf16 %v279, %v278
        %v302 = vpack.c.bf16 %v281, %v280
        %v303 = vpack.c.bf16 %v283, %v282
        %v304 = vpack.c.bf16 %v285, %v284
        %v305 = vpack.c.bf16 %v287, %v286
        %v306 = vpack.c.bf16 %v289, %v288
        %v307 = vpack.c.bf16 %v291, %v290
        %v308 = vld [vmem:[#allocation5] sm:$0xf]
        %v309 = vld [vmem:[#allocation5 + $0x4] sm:$0xf]
        %v310 = vld [vmem:[#allocation5 + $0x8] sm:$0xf]
        %v311 = vld [vmem:[#allocation5 + $0xc] sm:$0xf]
        %v312 = vld [vmem:[#allocation5 + $0x10] sm:$0xf]
        %v313 = vld [vmem:[#allocation5 + $0x14] sm:$0xf]
        %v314 = vld [vmem:[#allocation5 + $0x18] sm:$0xf]
        %v315 = vld [vmem:[#allocation5 + $0x1c] sm:$0xf]
        %v316 = vld [vmem:[#allocation5 + $0x20] sm:$0xf]
        %v317 = vld [vmem:[#allocation5 + $0x24] sm:$0xf]
        %v318 = vld [vmem:[#allocation5 + $0x28] sm:$0xf]
        %v319 = vld [vmem:[#allocation5 + $0x2c] sm:$0xf]
        %v320 = vld [vmem:[#allocation5 + $0x30] sm:$0xf]
        %v321 = vld [vmem:[#allocation5 + $0x34] sm:$0xf]
        %v322 = vld [vmem:[#allocation5 + $0x38] sm:$0xf]
        %v323 = vld [vmem:[#allocation5 + $0x3c] sm:$0xf]
        %v324 = vld [vmem:[%s2] sm:$0x1]
        %v326 = vperm.slane %v324, 0
        %v344 = vunpack.c.l.b16 %v308
        %v345 = vunpack.c.l.b16 %v309
        %v346 = vunpack.c.l.b16 %v310
        %v347 = vunpack.c.l.b16 %v311
        %v348 = vunpack.c.l.b16 %v312
        %v349 = vunpack.c.l.b16 %v313
        %v350 = vunpack.c.l.b16 %v314
        %v351 = vunpack.c.l.b16 %v315
        %v352 = vunpack.c.l.b16 %v316
        %v353 = vunpack.c.l.b16 %v317
        %v354 = vunpack.c.l.b16 %v318
        %v355 = vunpack.c.l.b16 %v319
        %v356 = vunpack.c.l.b16 %v320
        %v357 = vunpack.c.l.b16 %v321
        %v358 = vunpack.c.l.b16 %v322
        %v359 = vunpack.c.l.b16 %v323
        %v360 = vpack.c.b16 %v345, %v344
        %v361 = vpack.c.b16 %v347, %v346
        %v362 = vpack.c.b16 %v349, %v348
        %v363 = vpack.c.b16 %v351, %v350
        %v364 = vpack.c.b16 %v353, %v352
        %v365 = vpack.c.b16 %v355, %v354
        %v366 = vpack.c.b16 %v357, %v356
        %v367 = vpack.c.b16 %v359, %v358
        %376 = vmatpush.bf16.msra.mxu0 %v367
        %377 = vmatpush.bf16.msra.mxu0 %v366
        %378 = vmatpush.bf16.msra.mxu0 %v365
        %379 = vmatpush.bf16.msra.mxu0 %v364
        %380 = vmatpush.bf16.msra.mxu0 %v363
        %381 = vmatpush.bf16.msra.mxu0 %v362
        %382 = vmatpush.bf16.msra.mxu0 %v361
        %383 = vmatpush.bf16.msra.mxu0 %v360
        %384 = vmatmul.bf16.gmra.mxu0 %v292
        %v385 = vpop.f32.mrf.mxu0
        %v386 = vadd.f32 %v326, %v385
        %v387 = vpop.f32.mrf.mxu0
        %v388 = vadd.f32 %v326, %v387
        %389 = vmatmul.bf16.gmra.mxu0 %v293
        %v390 = vpop.f32.mrf.mxu0
        %v391 = vadd.f32 %v326, %v390
        %v392 = vpop.f32.mrf.mxu0
        %v393 = vadd.f32 %v326, %v392
        %394 = vmatmul.bf16.gmra.mxu0 %v294
        %v395 = vpop.f32.mrf.mxu0
        %v396 = vadd.f32 %v326, %v395
        %v397 = vpop.f32.mrf.mxu0
        %v398 = vadd.f32 %v326, %v397
        %399 = vmatmul.bf16.gmra.mxu0 %v295
        %v400 = vpop.f32.mrf.mxu0
        %v401 = vadd.f32 %v326, %v400
        %v402 = vpop.f32.mrf.mxu0
        %v403 = vadd.f32 %v326, %v402
        %404 = vmatmul.bf16.gmra.mxu0 %v296
        %v405 = vpop.f32.mrf.mxu0
        %v406 = vadd.f32 %v326, %v405
        %v407 = vpop.f32.mrf.mxu0
        %v408 = vadd.f32 %v326, %v407
        %409 = vmatmul.bf16.gmra.mxu0 %v297
        %v410 = vpop.f32.mrf.mxu0
        %v411 = vadd.f32 %v326, %v410
        %v412 = vpop.f32.mrf.mxu0
        %v413 = vadd.f32 %v326, %v412
        %414 = vmatmul.bf16.gmra.mxu0 %v298
        %v415 = vpop.f32.mrf.mxu0
        %v416 = vadd.f32 %v326, %v415
        %v417 = vpop.f32.mrf.mxu0
        %v418 = vadd.f32 %v326, %v417
        %419 = vmatmul.bf16.gmra.mxu0 %v299
        %v420 = vpop.f32.mrf.mxu0
        %v421 = vadd.f32 %v326, %v420
        %v422 = vpop.f32.mrf.mxu0
        %v423 = vadd.f32 %v326, %v422
        %424 = vmatmul.bf16.gmra.mxu0 %v300
        %v425 = vpop.f32.mrf.mxu0
        %v426 = vadd.f32 %v326, %v425
        %v427 = vpop.f32.mrf.mxu0
        %v428 = vadd.f32 %v326, %v427
        %429 = vmatmul.bf16.gmra.mxu0 %v301
        %v430 = vpop.f32.mrf.mxu0
        %v431 = vadd.f32 %v326, %v430
        %v432 = vpop.f32.mrf.mxu0
        %v433 = vadd.f32 %v326, %v432
        %434 = vmatmul.bf16.gmra.mxu0 %v302
        %v435 = vpop.f32.mrf.mxu0
        %v436 = vadd.f32 %v326, %v435
        %v437 = vpop.f32.mrf.mxu0
        %v438 = vadd.f32 %v326, %v437
        %439 = vmatmul.bf16.gmra.mxu0 %v303
        %v440 = vpop.f32.mrf.mxu0
        %v441 = vadd.f32 %v326, %v440
        %v442 = vpop.f32.mrf.mxu0
        %v443 = vadd.f32 %v326, %v442
        %444 = vmatmul.bf16.gmra.mxu0 %v304
        %v445 = vpop.f32.mrf.mxu0
        %v446 = vadd.f32 %v326, %v445
        %v447 = vpop.f32.mrf.mxu0
        %v448 = vadd.f32 %v326, %v447
        %449 = vmatmul.bf16.gmra.mxu0 %v305
        %v450 = vpop.f32.mrf.mxu0
        %v451 = vadd.f32 %v326, %v450
        %v452 = vpop.f32.mrf.mxu0
        %v453 = vadd.f32 %v326, %v452
        %454 = vmatmul.bf16.gmra.mxu0 %v306
        %v455 = vpop.f32.mrf.mxu0
        %v456 = vadd.f32 %v326, %v455
        %v457 = vpop.f32.mrf.mxu0
        %v458 = vadd.f32 %v326, %v457
        %459 = vmatmul.bf16.gmra.mxu0 %v307
        %v460 = vpop.f32.mrf.mxu0
        %v461 = vadd.f32 %v326, %v460
        %v462 = vpop.f32.mrf.mxu0
        %v463 = vadd.f32 %v326, %v462
        %464 = vdwg.mxu0
        %465 = vst [vmem:[%s253] sm:$0xff] %v386
        %466 = vst [vmem:[%s253 + $0x8] sm:$0xff] %v388
        %467 = vst [vmem:[%s253 + $0x10] sm:$0xff] %v391
        %468 = vst [vmem:[%s253 + $0x18] sm:$0xff] %v393
        %469 = vst [vmem:[%s253 + $0x20] sm:$0xff] %v396
        %470 = vst [vmem:[%s253 + $0x28] sm:$0xff] %v398
        %471 = vst [vmem:[%s253 + $0x30] sm:$0xff] %v401
        %472 = vst [vmem:[%s253 + $0x38] sm:$0xff] %v403
        %473 = vst [vmem:[%s253 + $0x40] sm:$0xff] %v406
        %474 = vst [vmem:[%s253 + $0x48] sm:$0xff] %v408
        %475 = vst [vmem:[%s253 + $0x50] sm:$0xff] %v411
        %476 = vst [vmem:[%s253 + $0x58] sm:$0xff] %v413
        %477 = vst [vmem:[%s253 + $0x60] sm:$0xff] %v416
        %478 = vst [vmem:[%s253 + $0x68] sm:$0xff] %v418
        %479 = vst [vmem:[%s253 + $0x70] sm:$0xff] %v421
        %480 = vst [vmem:[%s253 + $0x78] sm:$0xff] %v423
        %481 = vst [vmem:[%s253 + $0x80] sm:$0xff] %v426
        %482 = vst [vmem:[%s253 + $0x88] sm:$0xff] %v428
        %483 = vst [vmem:[%s253 + $0x90] sm:$0xff] %v431
        %484 = vst [vmem:[%s253 + $0x98] sm:$0xff] %v433
        %485 = vst [vmem:[%s253 + $0xa0] sm:$0xff] %v436
        %486 = vst [vmem:[%s253 + $0xa8] sm:$0xff] %v438
        %487 = vst [vmem:[%s253 + $0xb0] sm:$0xff] %v441
        %488 = vst [vmem:[%s253 + $0xb8] sm:$0xff] %v443
        %489 = vst [vmem:[%s253 + $0xc0] sm:$0xff] %v446
        %490 = vst [vmem:[%s253 + $0xc8] sm:$0xff] %v448
        %491 = vst [vmem:[%s253 + $0xd0] sm:$0xff] %v451
        %492 = vst [vmem:[%s253 + $0xd8] sm:$0xff] %v453
        %493 = vst [vmem:[%s253 + $0xe0] sm:$0xff] %v456
        %494 = vst [vmem:[%s253 + $0xe8] sm:$0xff] %v458
        %495 = vst [vmem:[%s253 + $0xf0] sm:$0xff] %v461
        %496 = vst [vmem:[%s253 + $0xf8] sm:$0xff] %v463
        %s497 = smul.u32 %s25, 256
        %v498 = vlaneseq
        %v499 = vshrl.u32 %v498, 7
        %v500 = vadd.s32 %v499, 8
        %v501 = vadd.s32 %v499, 16
        %v502 = vadd.s32 %v499, 24
        %v503 = vadd.s32 %v499, 32
        %v504 = vadd.s32 %v499, 40
        %v505 = vadd.s32 %v499, 48
        %v506 = vadd.s32 %v499, 56
        %v507 = vadd.s32 %v499, 64
        %v508 = vadd.s32 %v499, 72
        %v509 = vadd.s32 %v499, 80
        %v510 = vadd.s32 %v499, 88
        %v511 = vadd.s32 %v499, 96
        %v512 = vadd.s32 %v499, 104
        %v513 = vadd.s32 %v499, 112
        %v514 = vadd.s32 %v499, 120
        %v515 = vadd.s32 %v499, 128
        %v516 = vadd.s32 %v499, 136
        %v517 = vadd.s32 %v499, 144
        %v518 = vadd.s32 %v499, 152
        %v519 = vadd.s32 %v499, 160
        %v520 = vadd.s32 %v499, 168
        %v521 = vadd.s32 %v499, 176
        %v522 = vadd.s32 %v499, 184
        %v523 = vadd.s32 %v499, 192
        %v524 = vadd.s32 %v499, 200
        %v525 = vadd.s32 %v499, 208
        %v526 = vadd.s32 %v499, 216
        %v527 = vadd.s32 %v499, 224
        %v528 = vadd.s32 %v499, 232
        %v529 = vadd.s32 %v499, 240
        %v530 = vadd.s32 %v499, 248
        %v531 = vstv %s497
        %v532 = vadd.s32 %v531, %v499
        %v533 = vadd.s32 %v531, %v500
        %v534 = vadd.s32 %v531, %v501
        %v535 = vadd.s32 %v531, %v502
        %v536 = vadd.s32 %v531, %v503
        %v537 = vadd.s32 %v531, %v504
        %v538 = vadd.s32 %v531, %v505
        %v539 = vadd.s32 %v531, %v506
        %v540 = vadd.s32 %v531, %v507
        %v541 = vadd.s32 %v531, %v508
        %v542 = vadd.s32 %v531, %v509
        %v543 = vadd.s32 %v531, %v510
        %v544 = vadd.s32 %v531, %v511
        %v545 = vadd.s32 %v531, %v512
        %v546 = vadd.s32 %v531, %v513
        %v547 = vadd.s32 %v531, %v514
        %v548 = vadd.s32 %v531, %v515
        %v549 = vadd.s32 %v531, %v516
        %v550 = vadd.s32 %v531, %v517
        %v551 = vadd.s32 %v531, %v518
        %v552 = vadd.s32 %v531, %v519
        %v553 = vadd.s32 %v531, %v520
        %v554 = vadd.s32 %v531, %v521
        %v555 = vadd.s32 %v531, %v522
        %v556 = vadd.s32 %v531, %v523
        %v557 = vadd.s32 %v531, %v524
        %v558 = vadd.s32 %v531, %v525
        %v559 = vadd.s32 %v531, %v526
        %v560 = vadd.s32 %v531, %v527
        %v561 = vadd.s32 %v531, %v528
        %v562 = vadd.s32 %v531, %v529
        %v563 = vadd.s32 %v531, %v530
        %vm564 = vcmp.lt.s32.totalorder %v532, 300
        %vm565 = vcmp.lt.s32.totalorder %v533, 300
        %vm566 = vcmp.lt.s32.totalorder %v534, 300
        %vm567 = vcmp.lt.s32.totalorder %v535, 300
        %vm568 = vcmp.lt.s32.totalorder %v536, 300
        %vm569 = vcmp.lt.s32.totalorder %v537, 300
        %vm570 = vcmp.lt.s32.totalorder %v538, 300
        %vm571 = vcmp.lt.s32.totalorder %v539, 300
        %vm572 = vcmp.lt.s32.totalorder %v540, 300
        %vm573 = vcmp.lt.s32.totalorder %v541, 300
        %vm574 = vcmp.lt.s32.totalorder %v542, 300
        %vm575 = vcmp.lt.s32.totalorder %v543, 300
        %vm576 = vcmp.lt.s32.totalorder %v544, 300
        %vm577 = vcmp.lt.s32.totalorder %v545, 300
        %vm578 = vcmp.lt.s32.totalorder %v546, 300
        %vm579 = vcmp.lt.s32.totalorder %v547, 300
        %vm580 = vcmp.lt.s32.totalorder %v548, 300
        %vm581 = vcmp.lt.s32.totalorder %v549, 300
        %vm582 = vcmp.lt.s32.totalorder %v550, 300
        %vm583 = vcmp.lt.s32.totalorder %v551, 300
        %vm584 = vcmp.lt.s32.totalorder %v552, 300
        %vm585 = vcmp.lt.s32.totalorder %v553, 300
        %vm586 = vcmp.lt.s32.totalorder %v554, 300
        %vm587 = vcmp.lt.s32.totalorder %v555, 300
        %vm588 = vcmp.lt.s32.totalorder %v556, 300
        %vm589 = vcmp.lt.s32.totalorder %v557, 300
        %vm590 = vcmp.lt.s32.totalorder %v558, 300
        %vm591 = vcmp.lt.s32.totalorder %v559, 300
        %vm592 = vcmp.lt.s32.totalorder %v560, 300
        %vm593 = vcmp.lt.s32.totalorder %v561, 300
        %vm594 = vcmp.lt.s32.totalorder %v562, 300
        %vm595 = vcmp.lt.s32.totalorder %v563, 300
        %v596 = vsel %vm564, 1, 0
        %v597 = vsel %vm565, 1, 0
        %v598 = vsel %vm566, 1, 0
        %v599 = vsel %vm567, 1, 0
        %v600 = vsel %vm568, 1, 0
        %v601 = vsel %vm569, 1, 0
        %v602 = vsel %vm570, 1, 0
        %v603 = vsel %vm571, 1, 0
        %v604 = vsel %vm572, 1, 0
        %v605 = vsel %vm573, 1, 0
        %v606 = vsel %vm574, 1, 0
        %v607 = vsel %vm575, 1, 0
        %v608 = vsel %vm576, 1, 0
        %v609 = vsel %vm577, 1, 0
        %v610 = vsel %vm578, 1, 0
        %v611 = vsel %vm579, 1, 0
        %v612 = vsel %vm580, 1, 0
        %v613 = vsel %vm581, 1, 0
        %v614 = vsel %vm582, 1, 0
        %v615 = vsel %vm583, 1, 0
        %v616 = vsel %vm584, 1, 0
        %v617 = vsel %vm585, 1, 0
        %v618 = vsel %vm586, 1, 0
        %v619 = vsel %vm587, 1, 0
        %v620 = vsel %vm588, 1, 0
        %v621 = vsel %vm589, 1, 0
        %v622 = vsel %vm590, 1, 0
        %v623 = vsel %vm591, 1, 0
        %v624 = vsel %vm592, 1, 0
        %v625 = vsel %vm593, 1, 0
        %v626 = vsel %vm594, 1, 0
        %v627 = vsel %vm595, 1, 0
        %v628 = vcvt.s32.f32 %v596
        %v629 = vcvt.s32.f32 %v597
        %v630 = vcvt.s32.f32 %v598
        %v631 = vcvt.s32.f32 %v599
        %v632 = vcvt.s32.f32 %v600
        %v633 = vcvt.s32.f32 %v601
        %v634 = vcvt.s32.f32 %v602
        %v635 = vcvt.s32.f32 %v603
        %v636 = vcvt.s32.f32 %v604
        %v637 = vcvt.s32.f32 %v605
        %v638 = vcvt.s32.f32 %v606
        %v639 = vcvt.s32.f32 %v607
        %v640 = vcvt.s32.f32 %v608
        %v641 = vcvt.s32.f32 %v609
        %v642 = vcvt.s32.f32 %v610
        %v643 = vcvt.s32.f32 %v611
        %v644 = vcvt.s32.f32 %v612
        %v645 = vcvt.s32.f32 %v613
        %v646 = vcvt.s32.f32 %v614
        %v647 = vcvt.s32.f32 %v615
        %v648 = vcvt.s32.f32 %v616
        %v649 = vcvt.s32.f32 %v617
        %v650 = vcvt.s32.f32 %v618
        %v651 = vcvt.s32.f32 %v619
        %v652 = vcvt.s32.f32 %v620
        %v653 = vcvt.s32.f32 %v621
        %v654 = vcvt.s32.f32 %v622
        %v655 = vcvt.s32.f32 %v623
        %v656 = vcvt.s32.f32 %v624
        %v657 = vcvt.s32.f32 %v625
        %v658 = vcvt.s32.f32 %v626
        %v659 = vcvt.s32.f32 %v627
        %v660 = vmul.f32 %v386, %v628
        %v661 = vmul.f32 %v388, %v629
        %v662 = vmul.f32 %v391, %v630
        %v663 = vmul.f32 %v393, %v631
        %v664 = vmul.f32 %v396, %v632
        %v665 = vmul.f32 %v398, %v633
        %v666 = vmul.f32 %v401, %v634
        %v667 = vmul.f32 %v403, %v635
        %v668 = vmul.f32 %v406, %v636
        %v669 = vmul.f32 %v408, %v637
        %v670 = vmul.f32 %v411, %v638
        %v671 = vmul.f32 %v413, %v639
        %v672 = vmul.f32 %v416, %v640
        %v673 = vmul.f32 %v418, %v641
        %v674 = vmul.f32 %v421, %v642
        %v675 = vmul.f32 %v423, %v643
        %v676 = vmul.f32 %v426, %v644
        %v677 = vmul.f32 %v428, %v645
        %v678 = vmul.f32 %v431, %v646
        %v679 = vmul.f32 %v433, %v647
        %v680 = vmul.f32 %v436, %v648
        %v681 = vmul.f32 %v438, %v649
        %v682 = vmul.f32 %v441, %v650
        %v683 = vmul.f32 %v443, %v651
        %v684 = vmul.f32 %v446, %v652
        %v685 = vmul.f32 %v448, %v653
        %v686 = vmul.f32 %v451, %v654
        %v687 = vmul.f32 %v453, %v655
        %v688 = vmul.f32 %v456, %v656
        %v689 = vmul.f32 %v458, %v657
        %v690 = vmul.f32 %v461, %v658
        %v691 = vmul.f32 %v463, %v659
        %v692 = vadd.f32 %v660, %v661
        %v693 = vadd.f32 %v692, %v662
        %v694 = vadd.f32 %v693, %v663
        %v695 = vadd.f32 %v694, %v664
        %v696 = vadd.f32 %v695, %v665
        %v697 = vadd.f32 %v696, %v666
        %v698 = vadd.f32 %v697, %v667
        %v699 = vadd.f32 %v698, %v668
        %v700 = vadd.f32 %v699, %v669
        %v701 = vadd.f32 %v700, %v670
        %v702 = vadd.f32 %v701, %v671
        %v703 = vadd.f32 %v702, %v672
        %v704 = vadd.f32 %v703, %v673
        %v705 = vadd.f32 %v704, %v674
        %v706 = vadd.f32 %v705, %v675
        %v707 = vadd.f32 %v706, %v676
        %v708 = vadd.f32 %v707, %v677
        %v709 = vadd.f32 %v708, %v678
        %v710 = vadd.f32 %v709, %v679
        %v711 = vadd.f32 %v710, %v680
        %v712 = vadd.f32 %v711, %v681
        %v713 = vadd.f32 %v712, %v682
        %v714 = vadd.f32 %v713, %v683
        %v715 = vadd.f32 %v714, %v684
        %v716 = vadd.f32 %v715, %v685
        %v717 = vadd.f32 %v716, %v686
        %v718 = vadd.f32 %v717, %v687
        %v719 = vadd.f32 %v718, %v688
        %v720 = vadd.f32 %v719, %v689
        %v721 = vadd.f32 %v720, %v690
        %v722 = vadd.f32 %v721, %v691
        %v723 = vrot.slane %v722, 4
        %v724 = vadd.f32 %v722, %v723
        %v725 = vrot.slane %v724, 2
        %v726 = vadd.f32 %v724, %v725
        %v727 = vrot.slane %v726, 1
        %v728 = vadd.f32 %v726, %v727
        %v729 = vmul.f32 %v660, %v660
        %v730 = vmul.f32 %v661, %v661
        %v731 = vmul.f32 %v662, %v662
        %v732 = vmul.f32 %v663, %v663
        %v733 = vmul.f32 %v664, %v664
        %v734 = vmul.f32 %v665, %v665
        %v735 = vmul.f32 %v666, %v666
        %v736 = vmul.f32 %v667, %v667
        %v737 = vmul.f32 %v668, %v668
        %v738 = vmul.f32 %v669, %v669
        %v739 = vmul.f32 %v670, %v670
        %v740 = vmul.f32 %v671, %v671
        %v741 = vmul.f32 %v672, %v672
        %v742 = vmul.f32 %v673, %v673
        %v743 = vmul.f32 %v674, %v674
        %v744 = vmul.f32 %v675, %v675
        %v745 = vmul.f32 %v676, %v676
        %v746 = vmul.f32 %v677, %v677
        %v747 = vmul.f32 %v678, %v678
        %v748 = vmul.f32 %v679, %v679
        %v749 = vmul.f32 %v680, %v680
        %v750 = vmul.f32 %v681, %v681
        %v751 = vmul.f32 %v682, %v682
        %v752 = vmul.f32 %v683, %v683
        %v753 = vmul.f32 %v684, %v684
        %v754 = vmul.f32 %v685, %v685
        %v755 = vmul.f32 %v686, %v686
        %v756 = vmul.f32 %v687, %v687
        %v757 = vmul.f32 %v688, %v688
        %v758 = vmul.f32 %v689, %v689
        %v759 = vmul.f32 %v690, %v690
        %v760 = vmul.f32 %v691, %v691
        %v761 = vadd.f32 %v729, %v730
        %v762 = vadd.f32 %v761, %v731
        %v763 = vadd.f32 %v762, %v732
        %v764 = vadd.f32 %v763, %v733
        %v765 = vadd.f32 %v764, %v734
        %v766 = vadd.f32 %v765, %v735
        %v767 = vadd.f32 %v766, %v736
        %v768 = vadd.f32 %v767, %v737
        %v769 = vadd.f32 %v768, %v738
        %v770 = vadd.f32 %v769, %v739
        %v771 = vadd.f32 %v770, %v740
        %v772 = vadd.f32 %v771, %v741
        %v773 = vadd.f32 %v772, %v742
        %v774 = vadd.f32 %v773, %v743
        %v775 = vadd.f32 %v774, %v744
        %v776 = vadd.f32 %v775, %v745
        %v777 = vadd.f32 %v776, %v746
        %v778 = vadd.f32 %v777, %v747
        %v779 = vadd.f32 %v778, %v748
        %v780 = vadd.f32 %v779, %v749
        %v781 = vadd.f32 %v780, %v750
        %v782 = vadd.f32 %v781, %v751
        %v783 = vadd.f32 %v782, %v752
        %v784 = vadd.f32 %v783, %v753
        %v785 = vadd.f32 %v784, %v754
        %v786 = vadd.f32 %v785, %v755
        %v787 = vadd.f32 %v786, %v756
        %v788 = vadd.f32 %v787, %v757
        %v789 = vadd.f32 %v788, %v758
        %v790 = vadd.f32 %v789, %v759
        %v791 = vadd.f32 %v790, %v760
        %v792 = vrot.slane %v791, 4
        %v793 = vadd.f32 %v791, %v792
        %v794 = vrot.slane %v793, 2
        %v795 = vadd.f32 %v793, %v794
        %v796 = vrot.slane %v795, 1
        %v797 = vadd.f32 %v795, %v796
        %p798 = scmp.eq.s32.totalorder %s25, 0
        // Predicated region
        $region41: #{tpu_custom_call.1} parent=31 // pred_check
          %p799 = pneg %p798
        $region42: #{tpu_custom_call.1} parent=31 // pred_check_branch
          %801 = sbr.rel (%p799) target = $region44
        $region43: #{tpu_custom_call.1} parent=31 // pred_region
          %802 = vst [vmem:[#allocation8] sm:$0x1] 0.0
          %803 = vst [vmem:[#allocation10] sm:$0x1] 0.0
        $region44: #{tpu_custom_call.1} parent=31 // pred_fallthru
          _
        %v804 = vld [vmem:[#allocation8] sm:$0x1]
        %v805 = vadd.f32 %v804, %v728
        %806 = vst [vmem:[#allocation8] sm:$0x1] %v805
        %v807 = vld [vmem:[#allocation10] sm:$0x1]
        %v808 = vadd.f32 %v807, %v797
        %809 = vst [vmem:[#allocation10] sm:$0x1] %v808
        %s810 = sand.u32 %s101, 1
        %s811 = scalar_lea.sflag [#allocation4], %s810
        %s812 = sand.u32 %s101, 1
        %s813 = smul.addr %s812, 256
        %s814 = scalar_lea.vmem [#allocation7], %s813
        // Predicated region
        $region45: #{tpu_custom_call.1} parent=31 // pred_check
          %p815 = pneg %p111
        $region46: #{tpu_custom_call.1} parent=31 // pred_check_branch
          %817 = sbr.rel (%p815) target = $region48
        $region47: #{tpu_custom_call.1} parent=31 // pred_region
          %s818 = smul.u32 32, %s25
          %820 = vsyncadd %s811, 0
          %s821 = smul.addr %s818, 8
          %s822 = scalar_lea.hbm %s3, %s821
          %s823 = sshll.u32 %s814, 4
          %s824 = int_to_ptr.vmem [resolvable:$true] %s823
          %s825 = sshll.u32 %s822, 4
          %s826 = int_to_ptr.hbm [resolvable:$true] %s825
          %831 = dma.vmem_to_hbm [thread:$0]  %s824, 4096, %s826, %s811, 128, 128, 8
        $region48: #{tpu_custom_call.1} parent=31 // pred_fallthru
          _
        // Predicated region
        $region49: #{tpu_custom_call.1} parent=31 // pred_check
          %p832 = pneg %p132
        $region50: #{tpu_custom_call.1} parent=31 // pred_check_branch
          %834 = sbr.rel (%p832) target = $region52
        $region51: #{tpu_custom_call.1} parent=31 // pred_region
          %836 = vsyncadd [#allocation9], 0
          %s838 = sshll.u32 [#allocation8], 4
          %s839 = int_to_ptr.vmem [resolvable:$true] %s838
          %s840 = sshll.u32 %s4, 4
          %s841 = int_to_ptr.hbm [resolvable:$true] %s840
          %843 = dma.vmem_to_hbm [thread:$0]  %s839, 16, %s841, [#allocation9]
        $region52: #{tpu_custom_call.1} parent=31 // pred_fallthru
          _
        // Predicated region
        $region53: #{tpu_custom_call.1} parent=31 // pred_check
          %p844 = pneg %p153
        $region54: #{tpu_custom_call.1} parent=31 // pred_check_branch
          %846 = sbr.rel (%p844) target = $region56
        $region55: #{tpu_custom_call.1} parent=31 // pred_region
          %848 = vsyncadd [#allocation9], 0
          %s850 = sshll.u32 [#allocation10], 4
          %s851 = int_to_ptr.vmem [resolvable:$true] %s850
          %s852 = sshll.u32 %s5, 4
          %s853 = int_to_ptr.hbm [resolvable:$true] %s852
          %855 = dma.vmem_to_hbm [thread:$0]  %s851, 16, %s853, [#allocation9]
        $region56: #{tpu_custom_call.1} parent=31 // pred_fallthru
          _
        // Predicated region
        $region57: #{tpu_custom_call.1} parent=31 // pred_check
          %p856 = pneg %p132
        $region58: #{tpu_custom_call.1} parent=31 // pred_check_branch
          %858 = sbr.rel (%p856) target = $region60
        $region59: #{tpu_custom_call.1} parent=31 // pred_region
          %860 = dma.done [#allocation9], 16
        $region60: #{tpu_custom_call.1} parent=31 // pred_fallthru
          _
        // Predicated region
        $region61: #{tpu_custom_call.1} parent=31 // pred_check
          %p861 = pneg %p153
        $region62: #{tpu_custom_call.1} parent=31 // pred_check_branch
          %863 = sbr.rel (%p861) target = $region64
        $region63: #{tpu_custom_call.1} parent=31 // pred_region
          %865 = dma.done [#allocation9], 16
        $region64: #{tpu_custom_call.1} parent=31 // pred_fallthru
          _
      $region32: #{tpu_custom_call.1} parent=5 // pred_fallthru
        _
      %p866 = scmp.le.s32.totalorder 2, %s20
      // Predicated region
      $region65: #{tpu_custom_call.1} parent=5 // pred_check
        %p867 = pneg %p866
      $region66: #{tpu_custom_call.1} parent=5 // pred_check_branch
        %869 = sbr.rel (%p867) target = $region68
      $region67: #{tpu_custom_call.1} parent=5 // pred_region
        %s870 = ssub.s32 %s20, 2
        // Predicated region
        $region69: #{tpu_custom_call.1} parent=67 // pred_check
          %p871 = pneg %p117
        $region70: #{tpu_custom_call.1} parent=67 // pred_check_branch
          %873 = sbr.rel (%p871) target = $region72
        $region71: #{tpu_custom_call.1} parent=67 // pred_region
          %s874 = sand.u32 %s102, 1
          %s875 = scalar_lea.sflag [#allocation4], %s874
          %s876 = sand.u32 %s102, 1
          %s877 = smul.addr %s876, 256
          %s878 = scalar_lea.vmem [#allocation7], %s877
          %880 = dma.done %s875, 4096
        $region72: #{tpu_custom_call.1} parent=67 // pred_fallthru
          _
      $region68: #{tpu_custom_call.1} parent=5 // pred_fallthru
        _
    $region6: #{tpu_custom_call.1} parent=1 // loop_footer
      %s24 = sadd.s32 1, %s20
    $region7: #{tpu_custom_call.1} parent=1 // loop_footer_branch
      %19 = sbr.rel target = $region3
    $region8: #{tpu_custom_call.1} parent=1 // loop_exit
      _
    %881 = vsyncpa [#allocation3], 1
    %s882 = scalar_lea.sflag [#allocation3], 1
    %883 = vsyncpa %s882, 1
    %884 = vsyncpa [#allocation6], 1
    %885 = vsyncpa [#allocation4], 1
    %s886 = scalar_lea.sflag [#allocation4], 1
    %887 = vsyncpa %s886, 1
    %888 = vsyncpa [#allocation9], 1

</llo_original>
